<compile_context>
chip_gen: v5e
topology: v5e:2x2
jax: 0.10.0
libtpu: 0.0.40
codegen_flags: <defaults>
</compile_context>

<pallas_src>
import functools

import jax
import jax.numpy as jnp
import numpy as np
from jax.experimental import pallas as pl
from jax.experimental.pallas import tpu as pltpu

SKY_LABEL = 4        # synthetic stand-in for the repo's SKY_LABEL constant
LANES = 128
MAX_BLOCK_ROWS = 64  # 64 sublane-rows x 128 lanes = 8192 f32 elems / stream / step

LAMBDA_RGB = 1.0
LAMBDA_RGB_SHADING = 1.0


class HParams:
    l_opa = 1e-3
    l_distortion = 0.0        # TODO(synk): DistortionLoss needs the vren CUDA segmented-scan kernel
    l_depth_mono = 0.1
    l_normal_mono = 0.01
    l_normal_ref_rp = 0.0
    l_normal_ref_ro = 0.0
    l_sky = 0.0
    l_semantic = 0.0          # TODO(synk): semantic CE / sky branch disabled (undefined label taxonomy)
    l_sparsity = 0.0
    l_visibility = 0.0        # TODO(synk): visibility CE branch disabled
    l_visibility_T = 0.0
    l_deshadow = 0.0
    l_albedo = 0.0            # TODO(synk): albedo branch needs torch_scatter-style segment mean
    l_ambient = 0.05


def _pick_block_rows(rows, max_rows=MAX_BLOCK_ROWS):
    """Largest sublane-row tile: whole array if small, else a multiple of 8 dividing rows."""
    if rows <= max_rows:
        return rows
    for br in range(max_rows - max_rows % 8, 7, -8):
        if rows % br == 0:
            return br
    return rows  # no multiple-of-8 divisor: fall back to a single full-array block


# ----------------------------------------------------------------------------
# Kernel 1: masked reductions for compute_scale_and_shift + sum(ambient^2)
# ----------------------------------------------------------------------------
def _reduce_kernel(dp_ref, dt_ref, lbl_ref, amb_ref, out_ref, acc_ref):
    """Lane/sublane-wise partial sums accumulated in VMEM scratch (pure VPU adds);
    one cross-sublane + one cross-lane reduce on the final grid step only.

    acc_ref rows: 0 sum(m*dp*dp)  1 sum(m*dp)  2 sum(m)
                  3 sum(m*dp*dt)  4 sum(m*dt)  5 sum(amb*amb)
    out_ref: packed (6, 1) totals, written once at the end.
    """
    @pl.when(pl.program_id(0) == 0)
    def _init():
        acc_ref[...] = jnp.zeros_like(acc_ref)

    dp = dp_ref[...]
    dt = dt_ref[...]
    amb = amb_ref[...]
    m = (lbl_ref[...] != SKY_LABEL).astype(jnp.float32)   # sky mask computed in-kernel
    mp = m * dp
    acc_ref[0, :, :] += mp * dp
    acc_ref[1, :, :] += mp
    acc_ref[2, :, :] += m
    acc_ref[3, :, :] += mp * dt
    acc_ref[4, :, :] += m * dt
    acc_ref[5, :, :] += amb * amb

    @pl.when(pl.program_id(0) == pl.num_programs(0) - 1)
    def _finalize():
        part = jnp.sum(acc_ref[...], axis=1)                  # (6, 128)  one sublane reduce
        out_ref[...] = jnp.sum(part, axis=1, keepdims=True)   # (6, 1)    one lane reduce


def _masked_sums(dp2, dt2, lbl2, amb2):
    """dp2/dt2/amb2: (rows, 128) f32; lbl2: (rows, 128) int. Returns the 6 packed sums."""
    rows = dp2.shape[0]
    br = _pick_block_rows(rows)
    nt = rows // br
    vec = pl.BlockSpec((br, LANES), lambda i: (i, 0))
    # NOTE(v7x): a leading size-2 "parallel" axis with per-core partial outputs
    # would occupy both TensorCores; kept single-core here for simplicity.
    sums = pl.pallas_call(
        _reduce_kernel,
        grid_spec=pltpu.PrefetchScalarGridSpec(
            num_scalar_prefetch=0,
            grid=(nt,),
            in_specs=[vec, vec, vec, vec],
            out_specs=pl.BlockSpec((6, 1), lambda i: (0, 0)),
            scratch_shapes=[pltpu.VMEM((6, br, LANES), jnp.float32)],
        ),
        out_shape=jax.ShapeDtypeStruct((6, 1), jnp.float32),
        compiler_params=pltpu.CompilerParams(dimension_semantics=("arbitrary",)),
    )(dp2, dt2, lbl2, amb2)
    return sums[:, 0]


# ----------------------------------------------------------------------------
# Kernel 2: per-ray elementwise losses
# ----------------------------------------------------------------------------
def _loss_kernel(ss_ref,
                 rgb_ref, rgbs_ref, rgbgt_ref, opa_ref, npred_ref, ngt_ref,
                 dp_ref, dt_ref,
                 rgb_out, rgbs_out, opa_out, nm_out, dm_out,
                 *, l_opa, l_normal_mono, l_depth_mono):
    # rgb / rgb_shading L2
    rgb_gt = rgbgt_ref[...]
    rgb_out[...] = LAMBDA_RGB * (rgb_ref[...] - rgb_gt) ** 2
    rgbs_out[...] = LAMBDA_RGB_SHADING * (rgbs_ref[...] - rgb_gt) ** 2

    # opacity entropy
    o = opa_ref[...] + 1e-10
    opa_out[...] = l_opa * (-o * jnp.log(o))

    # normal_mono: F.normalize(dim=channel) + L1 + 0.1 * (-cos) (elementwise)
    def _normalize(x):                              # channel axis 0 -> plain VPU adds
        sumsq = jnp.sum(x * x, axis=0, keepdims=True)
        return x * jax.lax.rsqrt(jnp.maximum(sumsq, 1e-24))   # rsqrt on the EUP slot

    npn = _normalize(npred_ref[...])
    ngn = _normalize(ngt_ref[...])
    nm_out[...] = l_normal_mono * (jnp.abs(npn - ngn) + 0.1 * (-(npn * ngn)))

    # depth_mono: dist_decay * (scale * depth + shift - depth_gt)^2
    dp = dp_ref[...]
    dt = dt_ref[...]
    scale = ss_ref[0]
    shift = ss_ref[1]
    dm_out[...] = l_depth_mono * jnp.exp(-dp) * (scale * dp + shift - dt) ** 2


def nerf_loss(results, target, hp=HParams):
    n = results["depth"].shape[-1]
    assert n % LANES == 0, "number of rays must be a multiple of 128"
    rows = n // LANES

    def r3(x):   # (3, N) -> (3, rows, 128), metadata-only reshape
        return x.reshape(3, rows, LANES)

    def r1(x):   # (1, N) -> (rows, 128)
        return x.reshape(rows, LANES)

    dp2, dt2 = r1(results["depth"]), r1(target["depth"])
    lbl2 = r1(target["label"])
    ambt = r1(results["ambient"])

    # ---- kernel 1: packed masked sums -> scale / shift (tiny scalar XLA) ----
    sums = _masked_sums(dp2, dt2, lbl2, ambt)
    a00, a01, a11, b0, b1, amb_sq = [sums[i] for i in range(6)]
    det = a00 * a11 - a01 * a01
    safe_det = jnp.where(det != 0, det, 1.0)
    scale = jnp.where(det != 0, (a11 * b0 - a01 * b1) / safe_det, 0.0)
    shift = jnp.where(det != 0, (-a01 * b0 + a00 * b1) / safe_det, 0.0)
    ss = jnp.stack([scale, shift]).astype(jnp.float32)

    # ---- kernel 2: all elementwise losses in one pass ----
    br = _pick_block_rows(rows)
    nt = rows // br
    c3 = pl.BlockSpec((3, br, LANES), lambda i: (0, i, 0))
    c1 = pl.BlockSpec((br, LANES), lambda i: (i, 0))
    smem = pl.BlockSpec(memory_space=pltpu.SMEM)

    kern = functools.partial(
        _loss_kernel,
        l_opa=hp.l_opa,
        l_normal_mono=hp.l_normal_mono,
        l_depth_mono=hp.l_depth_mono,
    )
    rgb_l, rgbs_l, opa_l, nm_l, dm_l = pl.pallas_call(
        kern,
        grid_spec=pltpu.PrefetchScalarGridSpec(
            num_scalar_prefetch=0,
            grid=(nt,),
            in_specs=[smem, c3, c3, c3, c1, c3, c3, c1, c1],
            out_specs=[c3, c3, c1, c3, c1],
        ),
        out_shape=[
            jax.ShapeDtypeStruct((3, rows, LANES), jnp.float32),
            jax.ShapeDtypeStruct((3, rows, LANES), jnp.float32),
            jax.ShapeDtypeStruct((rows, LANES), jnp.float32),
            jax.ShapeDtypeStruct((3, rows, LANES), jnp.float32),
            jax.ShapeDtypeStruct((rows, LANES), jnp.float32),
        ],
        compiler_params=pltpu.CompilerParams(dimension_semantics=("parallel",)),
    )(ss, r3(results["rgb"]), r3(results["rgb_shading"]), r3(target["rgb"]),
      r1(results["opacity"]), r3(results["normal_pred"]), r3(target["normal"]),
      dp2, dt2)

    return {
        "rgb": rgb_l.reshape(3, n),
        "rgb_shading": rgbs_l.reshape(3, n),
        "opacity": opa_l.reshape(1, n),
        "normal_mono": nm_l.reshape(3, n),
        "depth_mono": dm_l.reshape(1, n),
        "ambient": hp.l_ambient * (amb_sq / results["ambient"].size),  # reg_ambient * mean(amb^2)
    }


# ----------------------------------------------------------------------------
# Plain-JAX reference (same math, no Pallas) for correctness checking
# ----------------------------------------------------------------------------
def nerf_loss_ref(results, target, hp=HParams):
    d = {}
    rgb_gt = target["rgb"]
    d["rgb"] = LAMBDA_RGB * (results["rgb"] - rgb_gt) ** 2
    d["rgb_shading"] = LAMBDA_RGB_SHADING * (results["rgb_shading"] - rgb_gt) ** 2
    o = results["opacity"] + 1e-10
    d["opacity"] = hp.l_opa * (-o * jnp.log(o))

    def _norm(x):
        nrm = jnp.sqrt(jnp.sum(x * x, axis=0, keepdims=True))
        return x / jnp.maximum(nrm, 1e-12)

    npn = _norm(results["normal_pred"])
    ngn = _norm(target["normal"])
    d["normal_mono"] = hp.l_normal_mono * (jnp.abs(npn - ngn) + 0.1 * (-(npn * ngn)))

    dp = results["depth"]
    dt = target["depth"]
    m = (target["label"] != SKY_LABEL).astype(jnp.float32)
    a00 = jnp.sum(m * dp * dp)
    a01 = jnp.sum(m * dp)
    a11 = jnp.sum(m)
    b0 = jnp.sum(m * dp * dt)
    b1 = jnp.sum(m * dt)
    det = a00 * a11 - a01 * a01
    scale = (a11 * b0 - a01 * b1) / det
    shift = (-a01 * b0 + a00 * b1) / det
    d["depth_mono"] = hp.l_depth_mono * jnp.exp(-dp) * (scale * dp + shift - dt) ** 2
    d["ambient"] = hp.l_ambient * jnp.mean(results["ambient"] ** 2)
    return d


if __name__ == "__main__":
    key = jax.random.PRNGKey(0)
    N = 16384  # number of rays (multiple of 128); gives rows=128, block_rows=64, grid=2
    ks = jax.random.split(key, 10)

    results = {
        "rgb": jax.random.uniform(ks[0], (3, N), jnp.float32),
        "rgb_shading": jax.random.uniform(ks[1], (3, N), jnp.float32),
        "opacity": jax.random.uniform(ks[2], (1, N), jnp.float32, 1e-3, 1.0),
        "normal_pred": jax.random.normal(ks[3], (3, N), jnp.float32),
        "depth": jax.random.uniform(ks[4], (1, N), jnp.float32, 0.1, 10.0),
        "ambient": jax.random.normal(ks[5], (1, N), jnp.float32),
    }
    target = {
        "rgb": jax.random.uniform(ks[6], (3, N), jnp.float32),
        "normal": jax.random.normal(ks[7], (3, N), jnp.float32),
        "depth": jax.random.uniform(ks[8], (1, N), jnp.float32, 0.1, 10.0),
        "label": jax.random.randint(ks[9], (1, N), 0, 8),
    }

    d = jax.block_until_ready(nerf_loss(results, target))
    d_ref = nerf_loss_ref(results, target)
    for k in d_ref:
        np.testing.assert_allclose(
            np.asarray(d[k]), np.asarray(d_ref[k]), rtol=1e-4, atol=1e-5
        )
    print("KERNEL_OK")
</pallas_src>

<mosaic_0001>
module attributes {stable_mosaic.version = 11 : i64} {
  func.func @_reduce_kernel(%arg0: i32, %arg1: memref<64x128xf32, #tpu.memory_space<vmem>>, %arg2: memref<64x128xf32, #tpu.memory_space<vmem>>, %arg3: memref<64x128xi32, #tpu.memory_space<vmem>>, %arg4: memref<64x128xf32, #tpu.memory_space<vmem>>, %arg5: memref<6x1xf32, #tpu.memory_space<vmem>>, %arg6: memref<6x64x128xf32, #tpu.memory_space<vmem>>) attributes {dimension_semantics = [#tpu.dimension_semantics<arbitrary>], iteration_bounds = array<i64: 2>, scalar_prefetch = 0 : i64, scratch_operands = 1 : i64, tpu.core_type = #tpu.core_type<tc>, window_params = [{transform_indices = @transform_0, window_bounds = array<i64: 64, 128>}, {transform_indices = @transform_1, window_bounds = array<i64: 64, 128>}, {transform_indices = @transform_2, window_bounds = array<i64: 64, 128>}, {transform_indices = @transform_3, window_bounds = array<i64: 64, 128>}, {pipeline_mode = #tpu.pipeline_mode<synchronous>, transform_indices = @transform_4, window_bounds = array<i64: 6, 1>}]} {
    %c0_i32 = arith.constant 0 : i32
    %0 = arith.cmpi eq, %arg0, %c0_i32 : i32
    %1 = arith.extui %0 : i1 to i32
    %c0_i32_0 = arith.constant 0 : i32
    %2 = arith.cmpi ne, %1, %c0_i32_0 : i32
    scf.if %2 {
      %cst = arith.constant 0.000000e+00 : f32
      %55 = vector.broadcast %cst : f32 to vector<6x64x128xf32>
      %c0_40 = arith.constant 0 : index
      %c0_41 = arith.constant 0 : index
      %c0_42 = arith.constant 0 : index
      %56 = vector.load %arg6[%c0_40, %c0_41, %c0_42] : memref<6x64x128xf32, #tpu.memory_space<vmem>>, vector<6x64x128xf32>
      tpu.vector_store %arg6[%c0_40, %c0_41, %c0_42], %55 {strides = array<i32>} : memref<6x64x128xf32, #tpu.memory_space<vmem>>, vector<6x64x128xf32>,
    } else {
    }
    %c0 = arith.constant 0 : index
    %c0_1 = arith.constant 0 : index
    %3 = vector.load %arg1[%c0, %c0_1] : memref<64x128xf32, #tpu.memory_space<vmem>>, vector<64x128xf32>
    %c0_2 = arith.constant 0 : index
    %c0_3 = arith.constant 0 : index
    %4 = vector.load %arg2[%c0_2, %c0_3] : memref<64x128xf32, #tpu.memory_space<vmem>>, vector<64x128xf32>
    %c0_4 = arith.constant 0 : index
    %c0_5 = arith.constant 0 : index
    %5 = vector.load %arg4[%c0_4, %c0_5] : memref<64x128xf32, #tpu.memory_space<vmem>>, vector<64x128xf32>
    %c0_6 = arith.constant 0 : index
    %c0_7 = arith.constant 0 : index
    %6 = vector.load %arg3[%c0_6, %c0_7] : memref<64x128xi32, #tpu.memory_space<vmem>>, vector<64x128xi32>
    %c4_i32 = arith.constant 4 : i32
    %7 = vector.broadcast %c4_i32 : i32 to vector<64x128xi32>
    %8 = arith.cmpi ne, %6, %7 : vector<64x128xi32>
    %9 = arith.extui %8 : vector<64x128xi1> to vector<64x128xi32>
    %10 = arith.sitofp %9 : vector<64x128xi32> to vector<64x128xf32>
    %11 = arith.mulf %10, %3 : vector<64x128xf32>
    %c0_8 = arith.constant 0 : index
    %c0_9 = arith.constant 0 : index
    %c0_10 = arith.constant 0 : index
    %12 = vector.load %arg6[%c0_8, %c0_9, %c0_10] : memref<6x64x128xf32, #tpu.memory_space<vmem>>, vector<1x64x128xf32>
    %13 = vector.shape_cast %12 : vector<1x64x128xf32> to vector<64x128xf32>
    %14 = arith.mulf %11, %3 : vector<64x128xf32>
    %15 = arith.addf %13, %14 : vector<64x128xf32>
    %c0_11 = arith.constant 0 : index
    %c0_12 = arith.constant 0 : index
    %c0_13 = arith.constant 0 : index
    %16 = vector.load %arg6[%c0_11, %c0_12, %c0_13] : memref<6x64x128xf32, #tpu.memory_space<vmem>>, vector<1x64x128xf32>
    %17 = vector.shape_cast %16 : vector<1x64x128xf32> to vector<64x128xf32>
    %18 = vector.shape_cast %15 : vector<64x128xf32> to vector<1x64x128xf32>
    tpu.vector_store %arg6[%c0_11, %c0_12, %c0_13], %18 {strides = array<i32>} : memref<6x64x128xf32, #tpu.memory_space<vmem>>, vector<1x64x128xf32>,
    %c1 = arith.constant 1 : index
    %c0_14 = arith.constant 0 : index
    %c0_15 = arith.constant 0 : index
    %19 = vector.load %arg6[%c1, %c0_14, %c0_15] : memref<6x64x128xf32, #tpu.memory_space<vmem>>, vector<1x64x128xf32>
    %20 = vector.shape_cast %19 : vector<1x64x128xf32> to vector<64x128xf32>
    %21 = arith.addf %20, %11 : vector<64x128xf32>
    %c1_16 = arith.constant 1 : index
    %c0_17 = arith.constant 0 : index
    %c0_18 = arith.constant 0 : index
    %22 = vector.load %arg6[%c1_16, %c0_17, %c0_18] : memref<6x64x128xf32, #tpu.memory_space<vmem>>, vector<1x64x128xf32>
    %23 = vector.shape_cast %22 : vector<1x64x128xf32> to vector<64x128xf32>
    %24 = vector.shape_cast %21 : vector<64x128xf32> to vector<1x64x128xf32>
    tpu.vector_store %arg6[%c1_16, %c0_17, %c0_18], %24 {strides = array<i32>} : memref<6x64x128xf32, #tpu.memory_space<vmem>>, vector<1x64x128xf32>,
    %c2 = arith.constant 2 : index
    %c0_19 = arith.constant 0 : index
    %c0_20 = arith.constant 0 : index
    %25 = vector.load %arg6[%c2, %c0_19, %c0_20] : memref<6x64x128xf32, #tpu.memory_space<vmem>>, vector<1x64x128xf32>
    %26 = vector.shape_cast %25 : vector<1x64x128xf32> to vector<64x128xf32>
    %27 = arith.addf %26, %10 : vector<64x128xf32>
    %c2_21 = arith.constant 2 : index
    %c0_22 = arith.constant 0 : index
    %c0_23 = arith.constant 0 : index
    %28 = vector.load %arg6[%c2_21, %c0_22, %c0_23] : memref<6x64x128xf32, #tpu.memory_space<vmem>>, vector<1x64x128xf32>
    %29 = vector.shape_cast %28 : vector<1x64x128xf32> to vector<64x128xf32>
    %30 = vector.shape_cast %27 : vector<64x128xf32> to vector<1x64x128xf32>
    tpu.vector_store %arg6[%c2_21, %c0_22, %c0_23], %30 {strides = array<i32>} : memref<6x64x128xf32, #tpu.memory_space<vmem>>, vector<1x64x128xf32>,
    %c3 = arith.constant 3 : index
    %c0_24 = arith.constant 0 : index
    %c0_25 = arith.constant 0 : index
    %31 = vector.load %arg6[%c3, %c0_24, %c0_25] : memref<6x64x128xf32, #tpu.memory_space<vmem>>, vector<1x64x128xf32>
    %32 = vector.shape_cast %31 : vector<1x64x128xf32> to vector<64x128xf32>
    %33 = arith.mulf %11, %4 : vector<64x128xf32>
    %34 = arith.addf %32, %33 : vector<64x128xf32>
    %c3_26 = arith.constant 3 : index
    %c0_27 = arith.constant 0 : index
    %c0_28 = arith.constant 0 : index
    %35 = vector.load %arg6[%c3_26, %c0_27, %c0_28] : memref<6x64x128xf32, #tpu.memory_space<vmem>>, vector<1x64x128xf32>
    %36 = vector.shape_cast %35 : vector<1x64x128xf32> to vector<64x128xf32>
    %37 = vector.shape_cast %34 : vector<64x128xf32> to vector<1x64x128xf32>
    tpu.vector_store %arg6[%c3_26, %c0_27, %c0_28], %37 {strides = array<i32>} : memref<6x64x128xf32, #tpu.memory_space<vmem>>, vector<1x64x128xf32>,
    %c4 = arith.constant 4 : index
    %c0_29 = arith.constant 0 : index
    %c0_30 = arith.constant 0 : index
    %38 = vector.load %arg6[%c4, %c0_29, %c0_30] : memref<6x64x128xf32, #tpu.memory_space<vmem>>, vector<1x64x128xf32>
    %39 = vector.shape_cast %38 : vector<1x64x128xf32> to vector<64x128xf32>
    %40 = arith.mulf %10, %4 : vector<64x128xf32>
    %41 = arith.addf %39, %40 : vector<64x128xf32>
    %c4_31 = arith.constant 4 : index
    %c0_32 = arith.constant 0 : index
    %c0_33 = arith.constant 0 : index
    %42 = vector.load %arg6[%c4_31, %c0_32, %c0_33] : memref<6x64x128xf32, #tpu.memory_space<vmem>>, vector<1x64x128xf32>
    %43 = vector.shape_cast %42 : vector<1x64x128xf32> to vector<64x128xf32>
    %44 = vector.shape_cast %41 : vector<64x128xf32> to vector<1x64x128xf32>
    tpu.vector_store %arg6[%c4_31, %c0_32, %c0_33], %44 {strides = array<i32>} : memref<6x64x128xf32, #tpu.memory_space<vmem>>, vector<1x64x128xf32>,
    %c5 = arith.constant 5 : index
    %c0_34 = arith.constant 0 : index
    %c0_35 = arith.constant 0 : index
    %45 = vector.load %arg6[%c5, %c0_34, %c0_35] : memref<6x64x128xf32, #tpu.memory_space<vmem>>, vector<1x64x128xf32>
    %46 = vector.shape_cast %45 : vector<1x64x128xf32> to vector<64x128xf32>
    %47 = arith.mulf %5, %5 : vector<64x128xf32>
    %48 = arith.addf %46, %47 : vector<64x128xf32>
    %c5_36 = arith.constant 5 : index
    %c0_37 = arith.constant 0 : index
    %c0_38 = arith.constant 0 : index
    %49 = vector.load %arg6[%c5_36, %c0_37, %c0_38] : memref<6x64x128xf32, #tpu.memory_space<vmem>>, vector<1x64x128xf32>
    %50 = vector.shape_cast %49 : vector<1x64x128xf32> to vector<64x128xf32>
    %51 = vector.shape_cast %48 : vector<64x128xf32> to vector<1x64x128xf32>
    tpu.vector_store %arg6[%c5_36, %c0_37, %c0_38], %51 {strides = array<i32>} : memref<6x64x128xf32, #tpu.memory_space<vmem>>, vector<1x64x128xf32>,
    %c1_i32 = arith.constant 1 : i32
    %52 = arith.cmpi eq, %arg0, %c1_i32 : i32
    %53 = arith.extui %52 : i1 to i32
    %c0_i32_39 = arith.constant 0 : i32
    %54 = arith.cmpi ne, %53, %c0_i32_39 : i32
    scf.if %54 {
      %c0_40 = arith.constant 0 : index
      %c0_41 = arith.constant 0 : index
      %c0_42 = arith.constant 0 : index
      %55 = vector.load %arg6[%c0_40, %c0_41, %c0_42] : memref<6x64x128xf32, #tpu.memory_space<vmem>>, vector<6x64x128xf32>
      %cst = arith.constant dense<0.000000e+00> : vector<6x128xf32>
      %56 = vector.multi_reduction <add>, %55, %cst [1] : vector<6x64x128xf32> to vector<6x128xf32>
      %cst_43 = arith.constant dense<0.000000e+00> : vector<6xf32>
      %57 = vector.multi_reduction <add>, %56, %cst_43 [1] : vector<6x128xf32> to vector<6xf32>
      %58 = vector.shape_cast %57 : vector<6xf32> to vector<6x1xf32>
      %c0_44 = arith.constant 0 : index
      %c0_45 = arith.constant 0 : index
      %59 = vector.load %arg5[%c0_44, %c0_45] : memref<6x1xf32, #tpu.memory_space<vmem>>, vector<6x1xf32>
      tpu.vector_store %arg5[%c0_44, %c0_45], %58 {strides = array<i32>} : memref<6x1xf32, #tpu.memory_space<vmem>>, vector<6x1xf32>,
    } else {
    }
    return
  }
  func.func @transform_0(%arg0: i32) -> (i32, i32) {
    %c0_i32 = arith.constant 0 : i32
    %c0_i32_0 = arith.constant 0 : i32
    return %arg0, %c0_i32 : i32, i32
  }
  func.func @transform_1(%arg0: i32) -> (i32, i32) {
    %c0_i32 = arith.constant 0 : i32
    %c0_i32_0 = arith.constant 0 : i32
    return %arg0, %c0_i32 : i32, i32
  }
  func.func @transform_2(%arg0: i32) -> (i32, i32) {
    %c0_i32 = arith.constant 0 : i32
    %c0_i32_0 = arith.constant 0 : i32
    return %arg0, %c0_i32 : i32, i32
  }
  func.func @transform_3(%arg0: i32) -> (i32, i32) {
    %c0_i32 = arith.constant 0 : i32
    %c0_i32_0 = arith.constant 0 : i32
    return %arg0, %c0_i32 : i32, i32
  }
  func.func @transform_4(%arg0: i32) -> (i32, i32) {
    %c0_i32 = arith.constant 0 : i32
    %c0_i32_0 = arith.constant 0 : i32
    %c0_i32_1 = arith.constant 0 : i32
    return %c0_i32, %c0_i32_0 : i32, i32
  }
}

</mosaic_0001>

<llo_original>
// kernel: tpu_custom_call.1
$region0: #{tpu_custom_call.1}
  #allocation0 [shape = 'u32[]', space=smem, size = 0x4, offset = 0x4, fixed_abs, tag = 'smem constant byte address 0x4 - core index']
  #allocation1 [shape = 'u32[72,128]{1,0:T(1,128)}', space=vmem, size = 0x9000, scoped, tag = 'internal scratch']
  #allocation2 [shape = 'f32[6,64,128]{2,1,0:T(8,128)}', space=vmem, size = 0x30000, scoped, tag = 'scratch operand']
  %s0 = inlined_call_operand.hbm [shape: f32[128,128], index: 0, kind: input, shape index: {}]
  %s1 = inlined_call_operand.hbm [shape: f32[128,128], index: 1, kind: input, shape index: {}]
  %s2 = inlined_call_operand.hbm [shape: s32[128,128], index: 2, kind: input, shape index: {}]
  %s3 = inlined_call_operand.hbm [shape: f32[128,128], index: 3, kind: input, shape index: {}]
  %s4 = inlined_call_operand.vmem [shape: f32[6,1], index: 4, kind: output, shape index: {}]
  %s5 = sld [smem:[#allocation0]]
  $region73: #{tpu_custom_call.1} parent=0
    _
  %s7 = ssub.s32 1, %s5
  %s8 = scalar_select 0, %s7, %s5
  $region1: #{tpu_custom_call.1} parent=0
    #allocation3 [shape = 'u8[65536]{0}', space=vmem, size = 0x10000, scoped, tag = 'input window, operand 0']
    #allocation4 [shape = 's32[2]{0}', space=sflag, size = 0x8, scoped, tag = 'scoped memory for tpu_custom_call.1']
    #allocation5 [shape = 'u8[65536]{0}', space=vmem, size = 0x10000, scoped, tag = 'input window, operand 1']
    #allocation6 [shape = 's32[2]{0}', space=sflag, size = 0x8, scoped, tag = 'scoped memory for tpu_custom_call.1']
    #allocation7 [shape = 'u8[65536]{0}', space=vmem, size = 0x10000, scoped, tag = 'input window, operand 2']
    #allocation8 [shape = 'u8[65536]{0}', space=vmem, size = 0x10000, scoped, tag = 'input window, operand 3']
    #allocation9 [shape = 's32[2]{0}', space=sflag, size = 0x8, scoped, tag = 'scoped memory for tpu_custom_call.1']
    %9 = vsyncpa [#allocation4], 0
    %s10 = scalar_lea.sflag [#allocation4], 1
    %11 = vsyncpa %s10, 0
    %12 = vsyncpa [#allocation6], 0
    %s13 = scalar_lea.sflag [#allocation6], 1
    %14 = vsyncpa %s13, 0
    %15 = vsyncpa [#allocation9], 0
    %s16 = scalar_lea.sflag [#allocation9], 1
    %17 = vsyncpa %s16, 0
    loop: start=0, step=1, limit=4
    $region2: #{tpu_custom_call.1} parent=1 // loop_pre_header
      _
    $region3: #{tpu_custom_call.1} parent=1 // loop_header
      %s19 = sphi 0, %s23
      %p20 = scmp.ge.s32.totalorder %s19, 4
      %s29 = sphi 0, %s31
      %s32 = sphi 0, %s29
      %s33 = sphi 0, %s32
      %s49 = sphi 0, %s33
      %s55 = sphi 0, %s57
      %s58 = sphi 0, %s55
      %s59 = sphi 0, %s58
      %s75 = sphi 0, %s59
      %s81 = sphi 0, %s83
      %s84 = sphi 0, %s81
      %s85 = sphi 0, %s84
      %s101 = sphi 0, %s85
      %s107 = sphi 0, %s109
      %s110 = sphi 0, %s107
      %s111 = sphi 0, %s110
      %s127 = sphi 0, %s111
      %s131 = sphi 0, %s131
      %s133 = sphi 0, %s131
      %s134 = sphi 0, %s133
      %s148 = sphi 0, %s134
    $region4: #{tpu_custom_call.1} parent=1 // loop_header_branch
      %22 = sbr.rel (%p20) target = $region8
    $region5: #{tpu_custom_call.1} parent=1 // loop_body
      %s24 = ssub.s32 %s19, 1
      %s25 = ssub.s32 %s19, 2
      %s26 = sadd.s32 %s19, 1
      %s27 = ssub.s32 %s19, %s26
      %p28 = scmp.eq.s32.totalorder %s27, 0
      %s30 = sadd.s32 %s29, 1
      %s31 = scalar_select %p28, %s29, %s30
      %p34 = pneg %p28
      %p35 = scmp.eq.s32.totalorder %s19, 1
      %p36 = por %p34, %p35
      %p37 = scmp.ne.s32.totalorder %s29, %s32
      %p38 = scmp.eq.s32.totalorder %s19, 0
      %p39 = por %p37, %p38
      %p40 = scmp.ne.s32.totalorder %s29, %s32
      %p41 = scmp.eq.s32.totalorder %s24, 1
      %p42 = por %p40, %p41
      %p43 = scmp.ne.s32.totalorder %s32, %s33
      %p44 = scmp.eq.s32.totalorder %s24, 0
      %p45 = por %p43, %p44
      %p46 = scmp.ne.s32.totalorder %s32, %s33
      %p47 = scmp.eq.s32.totalorder %s25, 1
      %p48 = por %p46, %p47
      %p50 = scmp.ne.s32.totalorder %s33, %s49
      %p51 = scmp.eq.s32.totalorder %s25, 0
      %p52 = por %p50, %p51
      %s53 = ssub.s32 %s19, %s26
      %p54 = scmp.eq.s32.totalorder %s53, 0
      %s56 = sadd.s32 %s55, 1
      %s57 = scalar_select %p54, %s55, %s56
      %p60 = pneg %p54
      %p61 = scmp.eq.s32.totalorder %s19, 1
      %p62 = por %p60, %p61
      %p63 = scmp.ne.s32.totalorder %s55, %s58
      %p64 = scmp.eq.s32.totalorder %s19, 0
      %p65 = por %p63, %p64
      %p66 = scmp.ne.s32.totalorder %s55, %s58
      %p67 = scmp.eq.s32.totalorder %s24, 1
      %p68 = por %p66, %p67
      %p69 = scmp.ne.s32.totalorder %s58, %s59
      %p70 = scmp.eq.s32.totalorder %s24, 0
      %p71 = por %p69, %p70
      %p72 = scmp.ne.s32.totalorder %s58, %s59
      %p73 = scmp.eq.s32.totalorder %s25, 1
      %p74 = por %p72, %p73
      %p76 = scmp.ne.s32.totalorder %s59, %s75
      %p77 = scmp.eq.s32.totalorder %s25, 0
      %p78 = por %p76, %p77
      %s79 = ssub.s32 %s19, %s26
      %p80 = scmp.eq.s32.totalorder %s79, 0
      %s82 = sadd.s32 %s81, 1
      %s83 = scalar_select %p80, %s81, %s82
      %p86 = pneg %p80
      %p87 = scmp.eq.s32.totalorder %s19, 1
      %p88 = por %p86, %p87
      %p89 = scmp.ne.s32.totalorder %s81, %s84
      %p90 = scmp.eq.s32.totalorder %s19, 0
      %p91 = por %p89, %p90
      %p92 = scmp.ne.s32.totalorder %s81, %s84
      %p93 = scmp.eq.s32.totalorder %s24, 1
      %p94 = por %p92, %p93
      %p95 = scmp.ne.s32.totalorder %s84, %s85
      %p96 = scmp.eq.s32.totalorder %s24, 0
      %p97 = por %p95, %p96
      %p98 = scmp.ne.s32.totalorder %s84, %s85
      %p99 = scmp.eq.s32.totalorder %s25, 1
      %p100 = por %p98, %p99
      %p102 = scmp.ne.s32.totalorder %s85, %s101
      %p103 = scmp.eq.s32.totalorder %s25, 0
      %p104 = por %p102, %p103
      %s105 = ssub.s32 %s19, %s26
      %p106 = scmp.eq.s32.totalorder %s105, 0
      %s108 = sadd.s32 %s107, 1
      %s109 = scalar_select %p106, %s107, %s108
      %p112 = pneg %p106
      %p113 = scmp.eq.s32.totalorder %s19, 1
      %p114 = por %p112, %p113
      %p115 = scmp.ne.s32.totalorder %s107, %s110
      %p116 = scmp.eq.s32.totalorder %s19, 0
      %p117 = por %p115, %p116
      %p118 = scmp.ne.s32.totalorder %s107, %s110
      %p119 = scmp.eq.s32.totalorder %s24, 1
      %p120 = por %p118, %p119
      %p121 = scmp.ne.s32.totalorder %s110, %s111
      %p122 = scmp.eq.s32.totalorder %s24, 0
      %p123 = por %p121, %p122
      %p124 = scmp.ne.s32.totalorder %s110, %s111
      %p125 = scmp.eq.s32.totalorder %s25, 1
      %p126 = por %p124, %p125
      %p128 = scmp.ne.s32.totalorder %s111, %s127
      %p129 = scmp.eq.s32.totalorder %s25, 0
      %p130 = por %p128, %p129
      %s132 = sadd.s32 %s131, 1
      %p135 = scmp.eq.s32.totalorder %s19, 1
      %p136 = scmp.ne.s32.totalorder %s131, %s133
      %p137 = scmp.eq.s32.totalorder %s19, 0
      %p138 = por %p136, %p137
      %p139 = scmp.ne.s32.totalorder %s131, %s133
      %p140 = scmp.eq.s32.totalorder %s24, 1
      %p141 = por %p139, %p140
      %p142 = scmp.ne.s32.totalorder %s133, %s134
      %p143 = scmp.eq.s32.totalorder %s24, 0
      %p144 = por %p142, %p143
      %p145 = scmp.ne.s32.totalorder %s133, %s134
      %p146 = scmp.eq.s32.totalorder %s25, 1
      %p147 = por %p145, %p146
      %p149 = scmp.ne.s32.totalorder %s134, %s148
      %p150 = scmp.eq.s32.totalorder %s25, 0
      %p151 = por %p149, %p150
      %p152 = scmp.le.s32.totalorder 1, %s19
      %p153 = scmp.lt.s32.totalorder %s19, 3
      %p154 = pnand %p152, %p153
      %p155 = pneg %p154
      // Predicated region
      $region9: #{tpu_custom_call.1} parent=5 // pred_check
        _
      $region10: #{tpu_custom_call.1} parent=5 // pred_check_branch
        %157 = sbr.rel (%p154) target = $region12
      $region11: #{tpu_custom_call.1} parent=5 // pred_region
        %s158 = ssub.s32 %s19, 1
      $region12: #{tpu_custom_call.1} parent=5 // pred_fallthru
        _
      %p159 = scmp.lt.s32.totalorder %s19, 2
      // Predicated region
      $region13: #{tpu_custom_call.1} parent=5 // pred_check
        %p160 = pneg %p159
      $region14: #{tpu_custom_call.1} parent=5 // pred_check_branch
        %162 = sbr.rel (%p160) target = $region16
      $region15: #{tpu_custom_call.1} parent=5 // pred_region
        // Predicated region
        $region17: #{tpu_custom_call.1} parent=15 // pred_check
          %p163 = pneg %p39
        $region18: #{tpu_custom_call.1} parent=15 // pred_check_branch
          %165 = sbr.rel (%p163) target = $region20
        $region19: #{tpu_custom_call.1} parent=15 // pred_region
          %s166 = sand.u32 %s29, 1
          %s167 = scalar_lea.sflag [#allocation4], %s166
          %s168 = sand.u32 %s29, 1
          %s169 = smul.addr %s168, 64
          %s170 = scalar_lea.vmem [#allocation3], %s169
          %s171 = smul.u32 8, %s19
          %173 = vsyncadd %s167, 0
          %s174 = smul.addr %s171, 8
          %s175 = scalar_lea.hbm %s0, %s174
          %s176 = sshll.u32 %s175, 4
          %s177 = int_to_ptr.hbm [resolvable:$true] %s176
          %s178 = sshll.u32 %s170, 4
          %s179 = int_to_ptr.vmem [resolvable:$true] %s178
          %184 = dma.hbm_to_vmem [thread:$0]  %s177, 1024, %s179, %s167, 128, 128, 8
        $region20: #{tpu_custom_call.1} parent=15 // pred_fallthru
          _
        // Predicated region
        $region21: #{tpu_custom_call.1} parent=15 // pred_check
          %p185 = pneg %p65
        $region22: #{tpu_custom_call.1} parent=15 // pred_check_branch
          %187 = sbr.rel (%p185) target = $region24
        $region23: #{tpu_custom_call.1} parent=15 // pred_region
          %s188 = sand.u32 %s19, 1
          %s189 = scalar_lea.sflag [#allocation6], %s188
          %s190 = sand.u32 %s55, 1
          %s191 = smul.addr %s190, 64
          %s192 = scalar_lea.vmem [#allocation5], %s191
          %s193 = smul.u32 8, %s19
          %195 = vsyncadd %s189, 0
          %s196 = smul.addr %s193, 8
          %s197 = scalar_lea.hbm %s1, %s196
          %s198 = sshll.u32 %s197, 4
          %s199 = int_to_ptr.hbm [resolvable:$true] %s198
          %s200 = sshll.u32 %s192, 4
          %s201 = int_to_ptr.vmem [resolvable:$true] %s200
          %206 = dma.hbm_to_vmem [thread:$0]  %s199, 1024, %s201, %s189, 128, 128, 8
        $region24: #{tpu_custom_call.1} parent=15 // pred_fallthru
          _
        // Predicated region
        $region25: #{tpu_custom_call.1} parent=15 // pred_check
          %p207 = pneg %p91
        $region26: #{tpu_custom_call.1} parent=15 // pred_check_branch
          %209 = sbr.rel (%p207) target = $region28
        $region27: #{tpu_custom_call.1} parent=15 // pred_region
          %s210 = sand.u32 %s19, 1
          %s211 = scalar_lea.sflag [#allocation6], %s210
          %s212 = sand.u32 %s81, 1
          %s213 = smul.addr %s212, 64
          %s214 = scalar_lea.vmem [#allocation7], %s213
          %s215 = smul.u32 8, %s19
          %217 = vsyncadd %s211, 0
          %s218 = smul.addr %s215, 8
          %s219 = scalar_lea.hbm %s2, %s218
          %s220 = sshll.u32 %s219, 4
          %s221 = int_to_ptr.hbm [resolvable:$true] %s220
          %s222 = sshll.u32 %s214, 4
          %s223 = int_to_ptr.vmem [resolvable:$true] %s222
          %228 = dma.hbm_to_vmem [thread:$0]  %s221, 1024, %s223, %s211, 128, 128, 8
        $region28: #{tpu_custom_call.1} parent=15 // pred_fallthru
          _
        // Predicated region
        $region29: #{tpu_custom_call.1} parent=15 // pred_check
          %p229 = pneg %p117
        $region30: #{tpu_custom_call.1} parent=15 // pred_check_branch
          %231 = sbr.rel (%p229) target = $region32
        $region31: #{tpu_custom_call.1} parent=15 // pred_region
          %s232 = sand.u32 %s107, 1
          %s233 = scalar_lea.sflag [#allocation9], %s232
          %s234 = sand.u32 %s107, 1
          %s235 = smul.addr %s234, 64
          %s236 = scalar_lea.vmem [#allocation8], %s235
          %s237 = smul.u32 8, %s19
          %239 = vsyncadd %s233, 0
          %s240 = smul.addr %s237, 8
          %s241 = scalar_lea.hbm %s3, %s240
          %s242 = sshll.u32 %s241, 4
          %s243 = int_to_ptr.hbm [resolvable:$true] %s242
          %s244 = sshll.u32 %s236, 4
          %s245 = int_to_ptr.vmem [resolvable:$true] %s244
          %250 = dma.hbm_to_vmem [thread:$0]  %s243, 1024, %s245, %s233, 128, 128, 8
        $region32: #{tpu_custom_call.1} parent=15 // pred_fallthru
          _
      $region16: #{tpu_custom_call.1} parent=5 // pred_fallthru
        _
      %p251 = scmp.le.s32.totalorder 1, %s19
      %p252 = scmp.lt.s32.totalorder %s19, 3
      %p253 = pnand %p251, %p252
      %p254 = pneg %p253
      // Predicated region
      $region33: #{tpu_custom_call.1} parent=5 // pred_check
        _
      $region34: #{tpu_custom_call.1} parent=5 // pred_check_branch
        %256 = sbr.rel (%p253) target = $region36
      $region35: #{tpu_custom_call.1} parent=5 // pred_region
        %s257 = ssub.s32 %s19, 1
        %s258 = sand.u32 %s32, 1
        %s259 = scalar_lea.sflag [#allocation4], %s258
        %s260 = sand.u32 %s32, 1
        %s261 = smul.addr %s260, 64
        %s262 = scalar_lea.vmem [#allocation3], %s261
        // Predicated region
        $region37: #{tpu_custom_call.1} parent=35 // pred_check
          %p263 = pneg %p45
        $region38: #{tpu_custom_call.1} parent=35 // pred_check_branch
          %265 = sbr.rel (%p263) target = $region40
        $region39: #{tpu_custom_call.1} parent=35 // pred_region
          %267 = dma.done %s259, 1024
        $region40: #{tpu_custom_call.1} parent=35 // pred_fallthru
          _
        %s268 = sand.u32 %s24, 1
        %s269 = scalar_lea.sflag [#allocation6], %s268
        %s270 = sand.u32 %s58, 1
        %s271 = smul.addr %s270, 64
        %s272 = scalar_lea.vmem [#allocation5], %s271
        // Predicated region
        $region41: #{tpu_custom_call.1} parent=35 // pred_check
          %p273 = pneg %p71
        $region42: #{tpu_custom_call.1} parent=35 // pred_check_branch
          %275 = sbr.rel (%p273) target = $region44
        $region43: #{tpu_custom_call.1} parent=35 // pred_region
          %277 = dma.done %s269, 1024
        $region44: #{tpu_custom_call.1} parent=35 // pred_fallthru
          _
        %s278 = sand.u32 %s24, 1
        %s279 = scalar_lea.sflag [#allocation6], %s278
        %s280 = sand.u32 %s84, 1
        %s281 = smul.addr %s280, 64
        %s282 = scalar_lea.vmem [#allocation7], %s281
        // Predicated region
        $region45: #{tpu_custom_call.1} parent=35 // pred_check
          %p283 = pneg %p97
        $region46: #{tpu_custom_call.1} parent=35 // pred_check_branch
          %285 = sbr.rel (%p283) target = $region48
        $region47: #{tpu_custom_call.1} parent=35 // pred_region
          %287 = dma.done %s279, 1024
        $region48: #{tpu_custom_call.1} parent=35 // pred_fallthru
          _
        %s288 = sand.u32 %s110, 1
        %s289 = scalar_lea.sflag [#allocation9], %s288
        %s290 = sand.u32 %s110, 1
        %s291 = smul.addr %s290, 64
        %s292 = scalar_lea.vmem [#allocation8], %s291
        // Predicated region
        $region49: #{tpu_custom_call.1} parent=35 // pred_check
          %p293 = pneg %p123
        $region50: #{tpu_custom_call.1} parent=35 // pred_check_branch
          %295 = sbr.rel (%p293) target = $region52
        $region51: #{tpu_custom_call.1} parent=35 // pred_region
          %297 = dma.done %s289, 1024
        $region52: #{tpu_custom_call.1} parent=35 // pred_fallthru
          _
        %s298 = sand.u32 %s32, 1
        %s299 = scalar_lea.sflag [#allocation4], %s298
        %s300 = sand.u32 %s32, 1
        %s301 = smul.addr %s300, 64
        %s302 = scalar_lea.vmem [#allocation3], %s301
        %p303 = pneg %p45
        %p304 = pneg %p42
        %s305 = sand.u32 %s24, 1
        %s306 = scalar_lea.sflag [#allocation6], %s305
        %s307 = sand.u32 %s58, 1
        %s308 = smul.addr %s307, 64
        %s309 = scalar_lea.vmem [#allocation5], %s308
        %p310 = pneg %p71
        %p311 = pneg %p68
        %s312 = sand.u32 %s24, 1
        %s313 = scalar_lea.sflag [#allocation6], %s312
        %s314 = sand.u32 %s84, 1
        %s315 = smul.addr %s314, 64
        %s316 = scalar_lea.vmem [#allocation7], %s315
        %p317 = pneg %p97
        %p318 = pneg %p94
        %s319 = sand.u32 %s110, 1
        %s320 = scalar_lea.sflag [#allocation9], %s319
        %s321 = sand.u32 %s110, 1
        %s322 = smul.addr %s321, 64
        %s323 = scalar_lea.vmem [#allocation8], %s322
        %p324 = pneg %p123
        %p325 = pneg %p120
        %p326 = pneg %p144
        %p327 = pneg %p141
        %s328 = smul.u32 8, %s24
        %s329 = smul.u32 8, %s24
        %s330 = smul.u32 8, %s24
        %s331 = smul.u32 8, %s24
        %p332 = scmp.eq.s32.totalorder %s24, 0
        // Predicated region
        $region53: #{tpu_custom_call.1} parent=35 // pred_check
          %p333 = pneg %p332
        $region54: #{tpu_custom_call.1} parent=35 // pred_check_branch
          %335 = sbr.rel (%p333) target = $region56
        $region55: #{tpu_custom_call.1} parent=35 // pred_region
          %336 = vst [vmem:[#allocation2] sm:$0xff] 0.0
          %337 = vst [vmem:[#allocation2 + $0x8] sm:$0xff] 0.0
          %338 = vst [vmem:[#allocation2 + $0x10] sm:$0xff] 0.0
          %339 = vst [vmem:[#allocation2 + $0x18] sm:$0xff] 0.0
          %340 = vst [vmem:[#allocation2 + $0x20] sm:$0xff] 0.0
          %341 = vst [vmem:[#allocation2 + $0x28] sm:$0xff] 0.0
          %342 = vst [vmem:[#allocation2 + $0x30] sm:$0xff] 0.0
          %343 = vst [vmem:[#allocation2 + $0x38] sm:$0xff] 0.0
          %344 = vst [vmem:[#allocation2 + $0x40] sm:$0xff] 0.0
          %345 = vst [vmem:[#allocation2 + $0x48] sm:$0xff] 0.0
          %346 = vst [vmem:[#allocation2 + $0x50] sm:$0xff] 0.0
          %347 = vst [vmem:[#allocation2 + $0x58] sm:$0xff] 0.0
          %348 = vst [vmem:[#allocation2 + $0x60] sm:$0xff] 0.0
          %349 = vst [vmem:[#allocation2 + $0x68] sm:$0xff] 0.0
          %350 = vst [vmem:[#allocation2 + $0x70] sm:$0xff] 0.0
          %351 = vst [vmem:[#allocation2 + $0x78] sm:$0xff] 0.0
          %352 = vst [vmem:[#allocation2 + $0x80] sm:$0xff] 0.0
          %353 = vst [vmem:[#allocation2 + $0x88] sm:$0xff] 0.0
          %354 = vst [vmem:[#allocation2 + $0x90] sm:$0xff] 0.0
          %355 = vst [vmem:[#allocation2 + $0x98] sm:$0xff] 0.0
          %356 = vst [vmem:[#allocation2 + $0xa0] sm:$0xff] 0.0
          %357 = vst [vmem:[#allocation2 + $0xa8] sm:$0xff] 0.0
          %358 = vst [vmem:[#allocation2 + $0xb0] sm:$0xff] 0.0
          %359 = vst [vmem:[#allocation2 + $0xb8] sm:$0xff] 0.0
          %360 = vst [vmem:[#allocation2 + $0xc0] sm:$0xff] 0.0
          %361 = vst [vmem:[#allocation2 + $0xc8] sm:$0xff] 0.0
          %362 = vst [vmem:[#allocation2 + $0xd0] sm:$0xff] 0.0
          %363 = vst [vmem:[#allocation2 + $0xd8] sm:$0xff] 0.0
          %364 = vst [vmem:[#allocation2 + $0xe0] sm:$0xff] 0.0
          %365 = vst [vmem:[#allocation2 + $0xe8] sm:$0xff] 0.0
          %366 = vst [vmem:[#allocation2 + $0xf0] sm:$0xff] 0.0
          %367 = vst [vmem:[#allocation2 + $0xf8] sm:$0xff] 0.0
          %368 = vst [vmem:[#allocation2 + $0x100] sm:$0xff] 0.0
          %369 = vst [vmem:[#allocation2 + $0x108] sm:$0xff] 0.0
          %370 = vst [vmem:[#allocation2 + $0x110] sm:$0xff] 0.0
          %371 = vst [vmem:[#allocation2 + $0x118] sm:$0xff] 0.0
          %372 = vst [vmem:[#allocation2 + $0x120] sm:$0xff] 0.0
          %373 = vst [vmem:[#allocation2 + $0x128] sm:$0xff] 0.0
          %374 = vst [vmem:[#allocation2 + $0x130] sm:$0xff] 0.0
          %375 = vst [vmem:[#allocation2 + $0x138] sm:$0xff] 0.0
          %376 = vst [vmem:[#allocation2 + $0x140] sm:$0xff] 0.0
          %377 = vst [vmem:[#allocation2 + $0x148] sm:$0xff] 0.0
          %378 = vst [vmem:[#allocation2 + $0x150] sm:$0xff] 0.0
          %379 = vst [vmem:[#allocation2 + $0x158] sm:$0xff] 0.0
          %380 = vst [vmem:[#allocation2 + $0x160] sm:$0xff] 0.0
          %381 = vst [vmem:[#allocation2 + $0x168] sm:$0xff] 0.0
          %382 = vst [vmem:[#allocation2 + $0x170] sm:$0xff] 0.0
          %383 = vst [vmem:[#allocation2 + $0x178] sm:$0xff] 0.0
        $region56: #{tpu_custom_call.1} parent=35 // pred_fallthru
          _
        %v384 = vld [vmem:[%s262] sm:$0xff]
        %v385 = vld [vmem:[%s262 + $0x8] sm:$0xff]
        %v386 = vld [vmem:[%s262 + $0x10] sm:$0xff]
        %v387 = vld [vmem:[%s262 + $0x18] sm:$0xff]
        %v388 = vld [vmem:[%s262 + $0x20] sm:$0xff]
        %v389 = vld [vmem:[%s262 + $0x28] sm:$0xff]
        %v390 = vld [vmem:[%s262 + $0x30] sm:$0xff]
        %v391 = vld [vmem:[%s262 + $0x38] sm:$0xff]
        %v392 = vld [vmem:[%s272] sm:$0xff]
        %v393 = vld [vmem:[%s272 + $0x8] sm:$0xff]
        %v394 = vld [vmem:[%s272 + $0x10] sm:$0xff]
        %v395 = vld [vmem:[%s272 + $0x18] sm:$0xff]
        %v396 = vld [vmem:[%s272 + $0x20] sm:$0xff]
        %v397 = vld [vmem:[%s272 + $0x28] sm:$0xff]
        %v398 = vld [vmem:[%s272 + $0x30] sm:$0xff]
        %v399 = vld [vmem:[%s272 + $0x38] sm:$0xff]
        %v400 = vld [vmem:[%s292] sm:$0xff]
        %v401 = vld [vmem:[%s292 + $0x8] sm:$0xff]
        %v402 = vld [vmem:[%s292 + $0x10] sm:$0xff]
        %v403 = vld [vmem:[%s292 + $0x18] sm:$0xff]
        %v404 = vld [vmem:[%s292 + $0x20] sm:$0xff]
        %v405 = vld [vmem:[%s292 + $0x28] sm:$0xff]
        %v406 = vld [vmem:[%s292 + $0x30] sm:$0xff]
        %v407 = vld [vmem:[%s292 + $0x38] sm:$0xff]
        %v408 = vld [vmem:[%s282] sm:$0xff]
        %v409 = vld [vmem:[%s282 + $0x8] sm:$0xff]
        %v410 = vld [vmem:[%s282 + $0x10] sm:$0xff]
        %v411 = vld [vmem:[%s282 + $0x18] sm:$0xff]
        %v412 = vld [vmem:[%s282 + $0x20] sm:$0xff]
        %v413 = vld [vmem:[%s282 + $0x28] sm:$0xff]
        %v414 = vld [vmem:[%s282 + $0x30] sm:$0xff]
        %v415 = vld [vmem:[%s282 + $0x38] sm:$0xff]
        %vm416 = vcmp.ne.s32.totalorder %v408, 4
        %vm417 = vcmp.ne.s32.totalorder %v409, 4
        %vm418 = vcmp.ne.s32.totalorder %v410, 4
        %vm419 = vcmp.ne.s32.totalorder %v411, 4
        %vm420 = vcmp.ne.s32.totalorder %v412, 4
        %vm421 = vcmp.ne.s32.totalorder %v413, 4
        %vm422 = vcmp.ne.s32.totalorder %v414, 4
        %vm423 = vcmp.ne.s32.totalorder %v415, 4
        %v424 = vsel %vm416, 1, 0
        %v425 = vsel %vm417, 1, 0
        %v426 = vsel %vm418, 1, 0
        %v427 = vsel %vm419, 1, 0
        %v428 = vsel %vm420, 1, 0
        %v429 = vsel %vm421, 1, 0
        %v430 = vsel %vm422, 1, 0
        %v431 = vsel %vm423, 1, 0
        %v432 = vcvt.s32.f32 %v424
        %v433 = vcvt.s32.f32 %v425
        %v434 = vcvt.s32.f32 %v426
        %v435 = vcvt.s32.f32 %v427
        %v436 = vcvt.s32.f32 %v428
        %v437 = vcvt.s32.f32 %v429
        %v438 = vcvt.s32.f32 %v430
        %v439 = vcvt.s32.f32 %v431
        %v440 = vmul.f32 %v432, %v384
        %v441 = vmul.f32 %v433, %v385
        %v442 = vmul.f32 %v434, %v386
        %v443 = vmul.f32 %v435, %v387
        %v444 = vmul.f32 %v436, %v388
        %v445 = vmul.f32 %v437, %v389
        %v446 = vmul.f32 %v438, %v390
        %v447 = vmul.f32 %v439, %v391
        %v448 = vld [vmem:[#allocation2] sm:$0xff]
        %v449 = vld [vmem:[#allocation2 + $0x8] sm:$0xff]
        %v450 = vld [vmem:[#allocation2 + $0x10] sm:$0xff]
        %v451 = vld [vmem:[#allocation2 + $0x18] sm:$0xff]
        %v452 = vld [vmem:[#allocation2 + $0x20] sm:$0xff]
        %v453 = vld [vmem:[#allocation2 + $0x28] sm:$0xff]
        %v454 = vld [vmem:[#allocation2 + $0x30] sm:$0xff]
        %v455 = vld [vmem:[#allocation2 + $0x38] sm:$0xff]
        %v456 = vmul.f32 %v440, %v384
        %v457 = vmul.f32 %v441, %v385
        %v458 = vmul.f32 %v442, %v386
        %v459 = vmul.f32 %v443, %v387
        %v460 = vmul.f32 %v444, %v388
        %v461 = vmul.f32 %v445, %v389
        %v462 = vmul.f32 %v446, %v390
        %v463 = vmul.f32 %v447, %v391
        %v464 = vadd.f32 %v448, %v456
        %v465 = vadd.f32 %v449, %v457
        %v466 = vadd.f32 %v450, %v458
        %v467 = vadd.f32 %v451, %v459
        %v468 = vadd.f32 %v452, %v460
        %v469 = vadd.f32 %v453, %v461
        %v470 = vadd.f32 %v454, %v462
        %v471 = vadd.f32 %v455, %v463
        %472 = vst [vmem:[#allocation2] sm:$0xff] %v464
        %473 = vst [vmem:[#allocation2 + $0x8] sm:$0xff] %v465
        %474 = vst [vmem:[#allocation2 + $0x10] sm:$0xff] %v466
        %475 = vst [vmem:[#allocation2 + $0x18] sm:$0xff] %v467
        %476 = vst [vmem:[#allocation2 + $0x20] sm:$0xff] %v468
        %477 = vst [vmem:[#allocation2 + $0x28] sm:$0xff] %v469
        %478 = vst [vmem:[#allocation2 + $0x30] sm:$0xff] %v470
        %479 = vst [vmem:[#allocation2 + $0x38] sm:$0xff] %v471
        %s480 = scalar_lea.vmem [#allocation2], 64
        %v481 = vld [vmem:[%s480] sm:$0xff]
        %v482 = vld [vmem:[%s480 + $0x8] sm:$0xff]
        %v483 = vld [vmem:[%s480 + $0x10] sm:$0xff]
        %v484 = vld [vmem:[%s480 + $0x18] sm:$0xff]
        %v485 = vld [vmem:[%s480 + $0x20] sm:$0xff]
        %v486 = vld [vmem:[%s480 + $0x28] sm:$0xff]
        %v487 = vld [vmem:[%s480 + $0x30] sm:$0xff]
        %v488 = vld [vmem:[%s480 + $0x38] sm:$0xff]
        %v489 = vadd.f32 %v481, %v440
        %v490 = vadd.f32 %v482, %v441
        %v491 = vadd.f32 %v483, %v442
        %v492 = vadd.f32 %v484, %v443
        %v493 = vadd.f32 %v485, %v444
        %v494 = vadd.f32 %v486, %v445
        %v495 = vadd.f32 %v487, %v446
        %v496 = vadd.f32 %v488, %v447
        %497 = vst [vmem:[%s480] sm:$0xff] %v489
        %498 = vst [vmem:[%s480 + $0x8] sm:$0xff] %v490
        %499 = vst [vmem:[%s480 + $0x10] sm:$0xff] %v491
        %500 = vst [vmem:[%s480 + $0x18] sm:$0xff] %v492
        %501 = vst [vmem:[%s480 + $0x20] sm:$0xff] %v493
        %502 = vst [vmem:[%s480 + $0x28] sm:$0xff] %v494
        %503 = vst [vmem:[%s480 + $0x30] sm:$0xff] %v495
        %504 = vst [vmem:[%s480 + $0x38] sm:$0xff] %v496
        %s505 = scalar_lea.vmem [#allocation2], 128
        %v506 = vld [vmem:[%s505] sm:$0xff]
        %v507 = vld [vmem:[%s505 + $0x8] sm:$0xff]
        %v508 = vld [vmem:[%s505 + $0x10] sm:$0xff]
        %v509 = vld [vmem:[%s505 + $0x18] sm:$0xff]
        %v510 = vld [vmem:[%s505 + $0x20] sm:$0xff]
        %v511 = vld [vmem:[%s505 + $0x28] sm:$0xff]
        %v512 = vld [vmem:[%s505 + $0x30] sm:$0xff]
        %v513 = vld [vmem:[%s505 + $0x38] sm:$0xff]
        %v514 = vadd.f32 %v506, %v432
        %v515 = vadd.f32 %v507, %v433
        %v516 = vadd.f32 %v508, %v434
        %v517 = vadd.f32 %v509, %v435
        %v518 = vadd.f32 %v510, %v436
        %v519 = vadd.f32 %v511, %v437
        %v520 = vadd.f32 %v512, %v438
        %v521 = vadd.f32 %v513, %v439
        %522 = vst [vmem:[%s505] sm:$0xff] %v514
        %523 = vst [vmem:[%s505 + $0x8] sm:$0xff] %v515
        %524 = vst [vmem:[%s505 + $0x10] sm:$0xff] %v516
        %525 = vst [vmem:[%s505 + $0x18] sm:$0xff] %v517
        %526 = vst [vmem:[%s505 + $0x20] sm:$0xff] %v518
        %527 = vst [vmem:[%s505 + $0x28] sm:$0xff] %v519
        %528 = vst [vmem:[%s505 + $0x30] sm:$0xff] %v520
        %529 = vst [vmem:[%s505 + $0x38] sm:$0xff] %v521
        %s530 = scalar_lea.vmem [#allocation2], 192
        %v531 = vld [vmem:[%s530] sm:$0xff]
        %v532 = vld [vmem:[%s530 + $0x8] sm:$0xff]
        %v533 = vld [vmem:[%s530 + $0x10] sm:$0xff]
        %v534 = vld [vmem:[%s530 + $0x18] sm:$0xff]
        %v535 = vld [vmem:[%s530 + $0x20] sm:$0xff]
        %v536 = vld [vmem:[%s530 + $0x28] sm:$0xff]
        %v537 = vld [vmem:[%s530 + $0x30] sm:$0xff]
        %v538 = vld [vmem:[%s530 + $0x38] sm:$0xff]
        %v539 = vmul.f32 %v440, %v392
        %v540 = vmul.f32 %v441, %v393
        %v541 = vmul.f32 %v442, %v394
        %v542 = vmul.f32 %v443, %v395
        %v543 = vmul.f32 %v444, %v396
        %v544 = vmul.f32 %v445, %v397
        %v545 = vmul.f32 %v446, %v398
        %v546 = vmul.f32 %v447, %v399
        %v547 = vadd.f32 %v531, %v539
        %v548 = vadd.f32 %v532, %v540
        %v549 = vadd.f32 %v533, %v541
        %v550 = vadd.f32 %v534, %v542
        %v551 = vadd.f32 %v535, %v543
        %v552 = vadd.f32 %v536, %v544
        %v553 = vadd.f32 %v537, %v545
        %v554 = vadd.f32 %v538, %v546
        %555 = vst [vmem:[%s530] sm:$0xff] %v547
        %556 = vst [vmem:[%s530 + $0x8] sm:$0xff] %v548
        %557 = vst [vmem:[%s530 + $0x10] sm:$0xff] %v549
        %558 = vst [vmem:[%s530 + $0x18] sm:$0xff] %v550
        %559 = vst [vmem:[%s530 + $0x20] sm:$0xff] %v551
        %560 = vst [vmem:[%s530 + $0x28] sm:$0xff] %v552
        %561 = vst [vmem:[%s530 + $0x30] sm:$0xff] %v553
        %562 = vst [vmem:[%s530 + $0x38] sm:$0xff] %v554
        %s563 = scalar_lea.vmem [#allocation2], 256
        %v564 = vld [vmem:[%s563] sm:$0xff]
        %v565 = vld [vmem:[%s563 + $0x8] sm:$0xff]
        %v566 = vld [vmem:[%s563 + $0x10] sm:$0xff]
        %v567 = vld [vmem:[%s563 + $0x18] sm:$0xff]
        %v568 = vld [vmem:[%s563 + $0x20] sm:$0xff]
        %v569 = vld [vmem:[%s563 + $0x28] sm:$0xff]
        %v570 = vld [vmem:[%s563 + $0x30] sm:$0xff]
        %v571 = vld [vmem:[%s563 + $0x38] sm:$0xff]
        %v572 = vmul.f32 %v432, %v392
        %v573 = vmul.f32 %v433, %v393
        %v574 = vmul.f32 %v434, %v394
        %v575 = vmul.f32 %v435, %v395
        %v576 = vmul.f32 %v436, %v396
        %v577 = vmul.f32 %v437, %v397
        %v578 = vmul.f32 %v438, %v398
        %v579 = vmul.f32 %v439, %v399
        %v580 = vadd.f32 %v564, %v572
        %v581 = vadd.f32 %v565, %v573
        %v582 = vadd.f32 %v566, %v574
        %v583 = vadd.f32 %v567, %v575
        %v584 = vadd.f32 %v568, %v576
        %v585 = vadd.f32 %v569, %v577
        %v586 = vadd.f32 %v570, %v578
        %v587 = vadd.f32 %v571, %v579
        %588 = vst [vmem:[%s563] sm:$0xff] %v580
        %589 = vst [vmem:[%s563 + $0x8] sm:$0xff] %v581
        %590 = vst [vmem:[%s563 + $0x10] sm:$0xff] %v582
        %591 = vst [vmem:[%s563 + $0x18] sm:$0xff] %v583
        %592 = vst [vmem:[%s563 + $0x20] sm:$0xff] %v584
        %593 = vst [vmem:[%s563 + $0x28] sm:$0xff] %v585
        %594 = vst [vmem:[%s563 + $0x30] sm:$0xff] %v586
        %595 = vst [vmem:[%s563 + $0x38] sm:$0xff] %v587
        %s596 = scalar_lea.vmem [#allocation2], 320
        %v597 = vld [vmem:[%s596] sm:$0xff]
        %v598 = vld [vmem:[%s596 + $0x8] sm:$0xff]
        %v599 = vld [vmem:[%s596 + $0x10] sm:$0xff]
        %v600 = vld [vmem:[%s596 + $0x18] sm:$0xff]
        %v601 = vld [vmem:[%s596 + $0x20] sm:$0xff]
        %v602 = vld [vmem:[%s596 + $0x28] sm:$0xff]
        %v603 = vld [vmem:[%s596 + $0x30] sm:$0xff]
        %v604 = vld [vmem:[%s596 + $0x38] sm:$0xff]
        %v605 = vmul.f32 %v400, %v400
        %v606 = vmul.f32 %v401, %v401
        %v607 = vmul.f32 %v402, %v402
        %v608 = vmul.f32 %v403, %v403
        %v609 = vmul.f32 %v404, %v404
        %v610 = vmul.f32 %v405, %v405
        %v611 = vmul.f32 %v406, %v406
        %v612 = vmul.f32 %v407, %v407
        %v613 = vadd.f32 %v597, %v605
        %v614 = vadd.f32 %v598, %v606
        %v615 = vadd.f32 %v599, %v607
        %v616 = vadd.f32 %v600, %v608
        %v617 = vadd.f32 %v601, %v609
        %v618 = vadd.f32 %v602, %v610
        %v619 = vadd.f32 %v603, %v611
        %v620 = vadd.f32 %v604, %v612
        %621 = vst [vmem:[%s596] sm:$0xff] %v613
        %622 = vst [vmem:[%s596 + $0x8] sm:$0xff] %v614
        %623 = vst [vmem:[%s596 + $0x10] sm:$0xff] %v615
        %624 = vst [vmem:[%s596 + $0x18] sm:$0xff] %v616
        %625 = vst [vmem:[%s596 + $0x20] sm:$0xff] %v617
        %626 = vst [vmem:[%s596 + $0x28] sm:$0xff] %v618
        %627 = vst [vmem:[%s596 + $0x30] sm:$0xff] %v619
        %628 = vst [vmem:[%s596 + $0x38] sm:$0xff] %v620
        %p629 = scmp.eq.s32.totalorder %s24, 1
        // Predicated region
        $region57: #{tpu_custom_call.1} parent=35 // pred_check
          %p630 = pneg %p629
        $region58: #{tpu_custom_call.1} parent=35 // pred_check_branch
          %632 = sbr.rel (%p630) target = $region60
        $region59: #{tpu_custom_call.1} parent=35 // pred_region
          %v633 = vld [vmem:[#allocation2] sm:$0xff]
          %v634 = vld [vmem:[#allocation2 + $0x8] sm:$0xff]
          %v635 = vld [vmem:[#allocation2 + $0x10] sm:$0xff]
          %v636 = vld [vmem:[#allocation2 + $0x18] sm:$0xff]
          %v637 = vld [vmem:[#allocation2 + $0x20] sm:$0xff]
          %v638 = vld [vmem:[#allocation2 + $0x28] sm:$0xff]
          %v639 = vld [vmem:[#allocation2 + $0x30] sm:$0xff]
          %v640 = vld [vmem:[#allocation2 + $0x38] sm:$0xff]
          %v641 = vld [vmem:[#allocation2 + $0x40] sm:$0xff]
          %v642 = vld [vmem:[#allocation2 + $0x48] sm:$0xff]
          %v643 = vld [vmem:[#allocation2 + $0x50] sm:$0xff]
          %v644 = vld [vmem:[#allocation2 + $0x58] sm:$0xff]
          %v645 = vld [vmem:[#allocation2 + $0x60] sm:$0xff]
          %v646 = vld [vmem:[#allocation2 + $0x68] sm:$0xff]
          %v647 = vld [vmem:[#allocation2 + $0x70] sm:$0xff]
          %v648 = vld [vmem:[#allocation2 + $0x78] sm:$0xff]
          %v649 = vld [vmem:[#allocation2 + $0x80] sm:$0xff]
          %v650 = vld [vmem:[#allocation2 + $0x88] sm:$0xff]
          %v651 = vld [vmem:[#allocation2 + $0x90] sm:$0xff]
          %v652 = vld [vmem:[#allocation2 + $0x98] sm:$0xff]
          %v653 = vld [vmem:[#allocation2 + $0xa0] sm:$0xff]
          %v654 = vld [vmem:[#allocation2 + $0xa8] sm:$0xff]
          %v655 = vld [vmem:[#allocation2 + $0xb0] sm:$0xff]
          %v656 = vld [vmem:[#allocation2 + $0xb8] sm:$0xff]
          %v657 = vld [vmem:[#allocation2 + $0xc0] sm:$0xff]
          %v658 = vld [vmem:[#allocation2 + $0xc8] sm:$0xff]
          %v659 = vld [vmem:[#allocation2 + $0xd0] sm:$0xff]
          %v660 = vld [vmem:[#allocation2 + $0xd8] sm:$0xff]
          %v661 = vld [vmem:[#allocation2 + $0xe0] sm:$0xff]
          %v662 = vld [vmem:[#allocation2 + $0xe8] sm:$0xff]
          %v663 = vld [vmem:[#allocation2 + $0xf0] sm:$0xff]
          %v664 = vld [vmem:[#allocation2 + $0xf8] sm:$0xff]
          %v665 = vld [vmem:[#allocation2 + $0x100] sm:$0xff]
          %v666 = vld [vmem:[#allocation2 + $0x108] sm:$0xff]
          %v667 = vld [vmem:[#allocation2 + $0x110] sm:$0xff]
          %v668 = vld [vmem:[#allocation2 + $0x118] sm:$0xff]
          %v669 = vld [vmem:[#allocation2 + $0x120] sm:$0xff]
          %v670 = vld [vmem:[#allocation2 + $0x128] sm:$0xff]
          %v671 = vld [vmem:[#allocation2 + $0x130] sm:$0xff]
          %v672 = vld [vmem:[#allocation2 + $0x138] sm:$0xff]
          %v673 = vld [vmem:[#allocation2 + $0x140] sm:$0xff]
          %v674 = vld [vmem:[#allocation2 + $0x148] sm:$0xff]
          %v675 = vld [vmem:[#allocation2 + $0x150] sm:$0xff]
          %v676 = vld [vmem:[#allocation2 + $0x158] sm:$0xff]
          %v677 = vld [vmem:[#allocation2 + $0x160] sm:$0xff]
          %v678 = vld [vmem:[#allocation2 + $0x168] sm:$0xff]
          %v679 = vld [vmem:[#allocation2 + $0x170] sm:$0xff]
          %v680 = vld [vmem:[#allocation2 + $0x178] sm:$0xff]
          %v681 = vadd.f32 %v633, %v634
          %v682 = vadd.f32 %v681, %v635
          %v683 = vadd.f32 %v682, %v636
          %v684 = vadd.f32 %v683, %v637
          %v685 = vadd.f32 %v684, %v638
          %v686 = vadd.f32 %v685, %v639
          %v687 = vadd.f32 %v686, %v640
          %v688 = vrot.slane %v687, 4
          %v689 = vadd.f32 %v687, %v688
          %v690 = vrot.slane %v689, 2
          %v691 = vadd.f32 %v689, %v690
          %v692 = vrot.slane %v691, 1
          %v693 = vadd.f32 %v691, %v692
          %v694 = vadd.f32 %v641, %v642
          %v695 = vadd.f32 %v694, %v643
          %v696 = vadd.f32 %v695, %v644
          %v697 = vadd.f32 %v696, %v645
          %v698 = vadd.f32 %v697, %v646
          %v699 = vadd.f32 %v698, %v647
          %v700 = vadd.f32 %v699, %v648
          %v701 = vrot.slane %v700, 4
          %v702 = vadd.f32 %v700, %v701
          %v703 = vrot.slane %v702, 2
          %v704 = vadd.f32 %v702, %v703
          %v705 = vrot.slane %v704, 1
          %v706 = vadd.f32 %v704, %v705
          %v707 = vadd.f32 %v649, %v650
          %v708 = vadd.f32 %v707, %v651
          %v709 = vadd.f32 %v708, %v652
          %v710 = vadd.f32 %v709, %v653
          %v711 = vadd.f32 %v710, %v654
          %v712 = vadd.f32 %v711, %v655
          %v713 = vadd.f32 %v712, %v656
          %v714 = vrot.slane %v713, 4
          %v715 = vadd.f32 %v713, %v714
          %v716 = vrot.slane %v715, 2
          %v717 = vadd.f32 %v715, %v716
          %v718 = vrot.slane %v717, 1
          %v719 = vadd.f32 %v717, %v718
          %v720 = vadd.f32 %v657, %v658
          %v721 = vadd.f32 %v720, %v659
          %v722 = vadd.f32 %v721, %v660
          %v723 = vadd.f32 %v722, %v661
          %v724 = vadd.f32 %v723, %v662
          %v725 = vadd.f32 %v724, %v663
          %v726 = vadd.f32 %v725, %v664
          %v727 = vrot.slane %v726, 4
          %v728 = vadd.f32 %v726, %v727
          %v729 = vrot.slane %v728, 2
          %v730 = vadd.f32 %v728, %v729
          %v731 = vrot.slane %v730, 1
          %v732 = vadd.f32 %v730, %v731
          %v733 = vadd.f32 %v665, %v666
          %v734 = vadd.f32 %v733, %v667
          %v735 = vadd.f32 %v734, %v668
          %v736 = vadd.f32 %v735, %v669
          %v737 = vadd.f32 %v736, %v670
          %v738 = vadd.f32 %v737, %v671
          %v739 = vadd.f32 %v738, %v672
          %v740 = vrot.slane %v739, 4
          %v741 = vadd.f32 %v739, %v740
          %v742 = vrot.slane %v741, 2
          %v743 = vadd.f32 %v741, %v742
          %v744 = vrot.slane %v743, 1
          %v745 = vadd.f32 %v743, %v744
          %v746 = vadd.f32 %v673, %v674
          %v747 = vadd.f32 %v746, %v675
          %v748 = vadd.f32 %v747, %v676
          %v749 = vadd.f32 %v748, %v677
          %v750 = vadd.f32 %v749, %v678
          %v751 = vadd.f32 %v750, %v679
          %v752 = vadd.f32 %v751, %v680
          %v753 = vrot.slane %v752, 4
          %v754 = vadd.f32 %v752, %v753
          %v755 = vrot.slane %v754, 2
          %v756 = vadd.f32 %v754, %v755
          %v757 = vrot.slane %v756, 1
          %v758 = vadd.f32 %v756, %v757
          %vm765 = vcmask 1041409
          %v766 = vsel %vm765, %v706, %v693
          %vm767 = vcmask 1042434
          %v768 = vsel %vm767, %v719, %v766
          %vm769 = vcmask 1043459
          %v770 = vsel %vm769, %v732, %v768
          %vm771 = vcmask 1044484
          %v772 = vsel %vm771, %v745, %v770
          %vm773 = vcmask 1045509
          %v774 = vsel %vm773, %v758, %v772
          %vm776 = vcmask 1045504
          %v777 = vsel %vm776, %v774, 0.0
          %778 = vadd.xlane.f32.xlu0 %v777
          %v779 = vpop.xlane.xlu0 %778
          %vm780 = vcmask 5120
          %781 = vst.msk [vmem:[%s4] sm:$0x3f] %vm780, %v779
        $region60: #{tpu_custom_call.1} parent=35 // pred_fallthru
          _
        // Predicated region
        $region61: #{tpu_custom_call.1} parent=35 // pred_check
          %p782 = pneg %p141
        $region62: #{tpu_custom_call.1} parent=35 // pred_check_branch
          %784 = sbr.rel (%p782) target = $region64
        $region63: #{tpu_custom_call.1} parent=35 // pred_region
          _
        $region64: #{tpu_custom_call.1} parent=35 // pred_fallthru
          _
        // Predicated region
        $region65: #{tpu_custom_call.1} parent=35 // pred_check
          %p785 = pneg %p141
        $region66: #{tpu_custom_call.1} parent=35 // pred_check_branch
          %787 = sbr.rel (%p785) target = $region68
        $region67: #{tpu_custom_call.1} parent=35 // pred_region
          _
        $region68: #{tpu_custom_call.1} parent=35 // pred_fallthru
          _
      $region36: #{tpu_custom_call.1} parent=5 // pred_fallthru
        _
      %p788 = scmp.le.s32.totalorder 2, %s19
      // Predicated region
      $region69: #{tpu_custom_call.1} parent=5 // pred_check
        %p789 = pneg %p788
      $region70: #{tpu_custom_call.1} parent=5 // pred_check_branch
        %791 = sbr.rel (%p789) target = $region72
      $region71: #{tpu_custom_call.1} parent=5 // pred_region
        %s792 = ssub.s32 %s19, 2
      $region72: #{tpu_custom_call.1} parent=5 // pred_fallthru
        _
    $region6: #{tpu_custom_call.1} parent=1 // loop_footer
      %s23 = sadd.s32 1, %s19
    $region7: #{tpu_custom_call.1} parent=1 // loop_footer_branch
      %18 = sbr.rel target = $region3
    $region8: #{tpu_custom_call.1} parent=1 // loop_exit
      _
    %793 = vsyncpa [#allocation4], 1
    %s794 = scalar_lea.sflag [#allocation4], 1
    %795 = vsyncpa %s794, 1
    %796 = vsyncpa [#allocation6], 1
    %s797 = scalar_lea.sflag [#allocation6], 1
    %798 = vsyncpa %s797, 1
    %799 = vsyncpa [#allocation9], 1
    %s800 = scalar_lea.sflag [#allocation9], 1
    %801 = vsyncpa %s800, 1

</llo_original>
